<compile_context>
chip_gen: v6e
topology: v6e:2x2x1
jax: 0.10.0
libtpu: 0.0.40
codegen_flags: <defaults>
</compile_context>

<pallas_src>
import jax
import jax.numpy as jnp
from jax.experimental import pallas as pl
from jax.experimental.pallas import tpu as pltpu

LANE = 128
SUB = 8
ALIGN = SUB * LANE                     # 1024 elements
TARGET_TILE_BYTES = 4 * 1024 * 1024    # per-input, per-pipeline-buffer tile target


def _cdiv(a, b):
    return (a + b - 1) // b


def _make_bce_kernel(Bt, Rt, R, Kp, needs_mask):
    full_blocks = R // Rt   # row-blocks whose rows are all < R (no masking needed)

    def kernel(x_ref, t_ref, out_ref):
        # x_ref / t_ref: (Bt, Rt, 128) input tiles (native dtype)
        # out_ref:       (Bt, 8, 128) f32 accumulator block (resident across k)
        s = pl.program_id(1)
        k = pl.program_id(2)
        g = s * Kp + k                          # global row-block index

        @pl.when(k == 0)
        def _():
            out_ref[...] = jnp.zeros_like(out_ref)

        x = x_ref[...].astype(jnp.float32)
        t = t_ref[...].astype(jnp.float32)
        log_x = jnp.maximum(jnp.log(x), -100.0)        # PyTorch BCELoss clamp
        log_1mx = jnp.maximum(jnp.log1p(-x), -100.0)
        # bce = -(t*log_x + (1-t)*log_1mx), refactored to save a mul+sub on the VPU
        bce = -(log_1mx + t * (log_x - log_1mx))

        def fold(v):
            # fold Rt rows onto 8 sublanes: pure vreg-wise VPU adds, no cross-lane work
            return v.reshape(Bt, Rt // SUB, SUB, LANE).sum(axis=1)

        if not needs_mask:
            out_ref[...] += fold(bce)
        else:
            # steady state: plain accumulate (no iota / compare / select)
            @pl.when(g < full_blocks)
            def _():
                out_ref[...] += fold(bce)

            # only the ragged tail (and duplicated split-k tail) pays the mask.
            # Keep this a SELECT: edge-padding data can be NaN and a multiply
            # by 0 would poison the accumulator (NaN*0 = NaN).
            @pl.when(g >= full_blocks)
            def _():
                row = jax.lax.broadcasted_iota(jnp.int32, (Rt, LANE), 0)
                valid = (g * Rt + row) < R
                out_ref[...] += fold(jnp.where(valid[None, :, :], bce, 0.0))

    return kernel


def bceloss(input_scale, target_scale):
    assert input_scale.shape == target_scale.shape
    B = input_scale.shape[0]
    M = 1
    for d in input_scale.shape[1:]:
        M *= d

    itemsize = jnp.dtype(input_scale.dtype).itemsize
    # rows per ~4 MiB input tile: 8192 for f32, 16384 for bf16 (multiple of 8)
    row_budget = max(SUB, (TARGET_TILE_BYTES // (LANE * itemsize)) // SUB * SUB)

    Mp = _cdiv(M, ALIGN) * ALIGN            # slice size rounded up to 8*128
    R = Mp // LANE                          # rows per slice (multiple of 8)

    Rt = min(R, row_budget)                 # rows per k step (multiple of 8)
    num_k = _cdiv(R, Rt)

    # Slices packed per grid step: amortize per-step overhead for small slices.
    if R >= row_budget:
        Bt = 1
    else:
        Bt = min(max(1, row_budget // R), B)
    # v7x megacore: keep >= 2 steps on the leading parallel axis when B >= 2.
    if B >= 2 and _cdiv(B, Bt) < 2:
        Bt = _cdiv(B, 2)
    B_grid = _cdiv(B, Bt)

    # Split-k: single-slice case -> shard row blocks over a 2nd parallel axis so
    # v7x's second TensorCore gets work; each split writes its own partial slab.
    S = 2 if (B_grid == 1 and num_k >= 2) else 1
    Kp = _cdiv(num_k, S)

    needs_mask = (R % Rt != 0) or (S * Kp != num_k)

    def prep(a):
        a = a.reshape(B, M)     # native dtype; upcast to f32 inside the kernel
        if Mp > M:
            # Fallback only for slice sizes not a multiple of 1024: host-side pad
            # with x=1, t=1 (BCE contribution exactly 0 -> final sum unchanged).
            # TODO(synk): this unaligned path pays an extra full HBM read+write of
            # both inputs (~2-3x traffic); aligned slice sizes avoid it entirely.
            a = jnp.pad(a, ((0, 0), (0, Mp - M)), constant_values=1)
        return a.reshape(B, R, LANE)

    xp = prep(input_scale)
    tp = prep(target_scale)

    if S * Kp != num_k:
        def row_idx(s, k):
            # clamp the duplicated split tail in-bounds; its contribution is masked to 0
            return jnp.minimum(s * Kp + k, num_k - 1)
    else:
        def row_idx(s, k):
            return s * Kp + k

    kernel = _make_bce_kernel(Bt, Rt, R, Kp, needs_mask)

    # 2 inputs x 2 pipeline buffers x (Bt*Rt*128)*itemsize + output buffers, with margin.
    vmem_need = 2 * 2 * Bt * Rt * LANE * itemsize + 2 * Bt * SUB * LANE * 4
    vmem_limit = int(min(48 * 1024 * 1024, max(32 * 1024 * 1024, 2 * vmem_need)))

    per_lane = pl.pallas_call(
        kernel,
        out_shape=jax.ShapeDtypeStruct((S, B_grid * Bt, SUB, LANE), jnp.float32),
        grid=(B_grid, S, Kp),
        in_specs=[
            pl.BlockSpec((Bt, Rt, LANE), lambda b, s, k: (b, row_idx(s, k), 0)),
            pl.BlockSpec((Bt, Rt, LANE), lambda b, s, k: (b, row_idx(s, k), 0)),
        ],
        out_specs=pl.BlockSpec((None, Bt, SUB, LANE), lambda b, s, k: (s, b, 0, 0)),
        compiler_params=pltpu.CompilerParams(
            dimension_semantics=("parallel", "parallel", "arbitrary"),
            vmem_limit_bytes=vmem_limit),
    )(xp, tp)

    # drop padded b-rows (>= B), reduce split/sublane/lane axes in the wrapper,
    # per-scale mean (BCELoss default reduction), then sum over the zip.
    per_slice_sum = per_lane[:, :B].sum(axis=(0, 2, 3))
    return (per_slice_sum / jnp.float32(M)).sum()


def bceloss_ref(x, t):
    x = x.astype(jnp.float32)
    t = t.astype(jnp.float32)
    lx = jnp.maximum(jnp.log(x), -100.0)
    l1 = jnp.maximum(jnp.log1p(-x), -100.0)
    bce = -(t * lx + (1.0 - t) * l1)
    per = bce.reshape(x.shape[0], -1).mean(axis=1)
    return per.sum()


if __name__ == "__main__":
    key = jax.random.PRNGKey(0)

    # Primary case: 2 scales of (4, 16, 16) probability maps.
    k1, k2, k3, k4 = jax.random.split(key, 4)
    x1 = jax.nn.sigmoid(jax.random.normal(k1, (2, 4, 16, 16), jnp.float32))
    t1 = jax.random.uniform(k2, (2, 4, 16, 16), dtype=jnp.float32)
    out1 = bceloss(x1, t1)
    jax.block_until_ready(out1)
    ref1 = bceloss_ref(x1, t1)
    assert jnp.allclose(out1, ref1, rtol=1e-3, atol=1e-5), (out1, ref1)

    # Secondary case: 4 small scales -> exercises the Bt slice-packing path.
    x2 = jax.nn.sigmoid(jax.random.normal(k3, (4, 2, 16, 32), jnp.float32))
    t2 = jax.random.uniform(k4, (4, 2, 16, 32), dtype=jnp.float32)
    out2 = bceloss(x2, t2)
    jax.block_until_ready(out2)
    ref2 = bceloss_ref(x2, t2)
    assert jnp.allclose(out2, ref2, rtol=1e-3, atol=1e-5), (out2, ref2)

    print("KERNEL_OK")
</pallas_src>

<mosaic_0001>
module attributes {stable_mosaic.version = 11 : i64} {
  func.func @kernel(%arg0: i32, %arg1: i32, %arg2: i32, %arg3: memref<1x8x128xf32, #tpu.memory_space<vmem>>, %arg4: memref<1x8x128xf32, #tpu.memory_space<vmem>>, %arg5: memref<1x1x8x128xf32, #tpu.memory_space<vmem>>) attributes {dimension_semantics = [#tpu.dimension_semantics<parallel>, #tpu.dimension_semantics<parallel>, #tpu.dimension_semantics<arbitrary>], iteration_bounds = array<i64: 2, 1, 1>, scalar_prefetch = 0 : i64, scratch_operands = 0 : i64, tpu.core_type = #tpu.core_type<tc>, window_params = [{transform_indices = @transform_0, window_bounds = array<i64: 1, 8, 128>}, {transform_indices = @transform_1, window_bounds = array<i64: 1, 8, 128>}, {transform_indices = @transform_2, window_bounds = array<i64: 1, 1, 8, 128>}]} {
    %c0_i32 = arith.constant 0 : i32
    %0 = arith.cmpi eq, %arg2, %c0_i32 : i32
    %1 = arith.extui %0 : i1 to i32
    %c0_i32_0 = arith.constant 0 : i32
    %2 = arith.cmpi ne, %1, %c0_i32_0 : i32
    scf.if %2 {
      %cst_18 = arith.constant 0.000000e+00 : f32
      %26 = vector.broadcast %cst_18 : f32 to vector<1x8x128xf32>
      %c0_19 = arith.constant 0 : index
      %c0_20 = arith.constant 0 : index
      %c0_21 = arith.constant 0 : index
      %c0_22 = arith.constant 0 : index
      %27 = vector.load %arg5[%c0_19, %c0_20, %c0_21, %c0_22] : memref<1x1x8x128xf32, #tpu.memory_space<vmem>>, vector<1x1x8x128xf32>
      %28 = vector.shape_cast %27 : vector<1x1x8x128xf32> to vector<1x8x128xf32>
      %29 = vector.shape_cast %26 : vector<1x8x128xf32> to vector<1x1x8x128xf32>
      tpu.vector_store %arg5[%c0_19, %c0_20, %c0_21, %c0_22], %29 {strides = array<i32>} : memref<1x1x8x128xf32, #tpu.memory_space<vmem>>, vector<1x1x8x128xf32>,
    } else {
    }
    %c0 = arith.constant 0 : index
    %c0_1 = arith.constant 0 : index
    %c0_2 = arith.constant 0 : index
    %3 = vector.load %arg3[%c0, %c0_1, %c0_2] : memref<1x8x128xf32, #tpu.memory_space<vmem>>, vector<1x8x128xf32>
    %c0_3 = arith.constant 0 : index
    %c0_4 = arith.constant 0 : index
    %c0_5 = arith.constant 0 : index
    %4 = vector.load %arg4[%c0_3, %c0_4, %c0_5] : memref<1x8x128xf32, #tpu.memory_space<vmem>>, vector<1x8x128xf32>
    %5 = math.log %3 : vector<1x8x128xf32>
    %cst = arith.constant -1.000000e+02 : f32
    %6 = vector.broadcast %cst : f32 to vector<1x8x128xf32>
    %7 = arith.maximumf %5, %6 : vector<1x8x128xf32>
    %cst_6 = arith.constant 0.000000e+00 : f32
    %8 = vector.broadcast %cst_6 : f32 to vector<1x8x128xf32>
    %9 = arith.subf %8, %3 : vector<1x8x128xf32>
    %10 = math.log1p %9 : vector<1x8x128xf32>
    %cst_7 = arith.constant -1.000000e+02 : f32
    %11 = vector.broadcast %cst_7 : f32 to vector<1x8x128xf32>
    %12 = arith.maximumf %10, %11 : vector<1x8x128xf32>
    %13 = arith.subf %7, %12 : vector<1x8x128xf32>
    %14 = arith.mulf %4, %13 : vector<1x8x128xf32>
    %15 = arith.addf %12, %14 : vector<1x8x128xf32>
    %cst_8 = arith.constant 0.000000e+00 : f32
    %16 = vector.broadcast %cst_8 : f32 to vector<1x8x128xf32>
    %17 = arith.subf %16, %15 : vector<1x8x128xf32>
    %c0_9 = arith.constant 0 : index
    %c0_10 = arith.constant 0 : index
    %c0_11 = arith.constant 0 : index
    %c0_12 = arith.constant 0 : index
    %18 = vector.load %arg5[%c0_9, %c0_10, %c0_11, %c0_12] : memref<1x1x8x128xf32, #tpu.memory_space<vmem>>, vector<1x1x8x128xf32>
    %19 = vector.shape_cast %18 : vector<1x1x8x128xf32> to vector<1x8x128xf32>
    %20 = vector.shape_cast %17 : vector<1x8x128xf32> to vector<1x1x8x128xf32>
    %cst_13 = arith.constant dense<0.000000e+00> : vector<1x8x128xf32>
    %21 = vector.multi_reduction <add>, %20, %cst_13 [1] : vector<1x1x8x128xf32> to vector<1x8x128xf32>
    %22 = arith.addf %19, %21 : vector<1x8x128xf32>
    %c0_14 = arith.constant 0 : index
    %c0_15 = arith.constant 0 : index
    %c0_16 = arith.constant 0 : index
    %c0_17 = arith.constant 0 : index
    %23 = vector.load %arg5[%c0_14, %c0_15, %c0_16, %c0_17] : memref<1x1x8x128xf32, #tpu.memory_space<vmem>>, vector<1x1x8x128xf32>
    %24 = vector.shape_cast %23 : vector<1x1x8x128xf32> to vector<1x8x128xf32>
    %25 = vector.shape_cast %22 : vector<1x8x128xf32> to vector<1x1x8x128xf32>
    tpu.vector_store %arg5[%c0_14, %c0_15, %c0_16, %c0_17], %25 {strides = array<i32>} : memref<1x1x8x128xf32, #tpu.memory_space<vmem>>, vector<1x1x8x128xf32>,
    return
  }
  func.func @transform_0(%arg0: i32, %arg1: i32, %arg2: i32) -> (i32, i32, i32) {
    %c1_i32 = arith.constant 1 : i32
    %0 = arith.muli %arg1, %c1_i32 : i32
    %1 = arith.addi %0, %arg2 : i32
    %c0_i32 = arith.constant 0 : i32
    %c0_i32_0 = arith.constant 0 : i32
    return %arg0, %1, %c0_i32 : i32, i32, i32
  }
  func.func @transform_1(%arg0: i32, %arg1: i32, %arg2: i32) -> (i32, i32, i32) {
    %c1_i32 = arith.constant 1 : i32
    %0 = arith.muli %arg1, %c1_i32 : i32
    %1 = arith.addi %0, %arg2 : i32
    %c0_i32 = arith.constant 0 : i32
    %c0_i32_0 = arith.constant 0 : i32
    return %arg0, %1, %c0_i32 : i32, i32, i32
  }
  func.func @transform_2(%arg0: i32, %arg1: i32, %arg2: i32) -> (i32, i32, i32, i32) {
    %c0_i32 = arith.constant 0 : i32
    %c0_i32_0 = arith.constant 0 : i32
    %c0_i32_1 = arith.constant 0 : i32
    return %arg1, %arg0, %c0_i32, %c0_i32_0 : i32, i32, i32, i32
  }
}

</mosaic_0001>

<llo_original>
// kernel: tpu_custom_call.1
$region0: #{tpu_custom_call.1}
  #allocation0 [shape = 'u32[]', space=smem, size = 0x4, offset = 0x4, fixed_abs, tag = 'smem constant byte address 0x4 - core index']
  #allocation1 [shape = 'u32[144,128]{1,0:T(1,128)}', space=vmem, size = 0x12000, scoped, tag = 'internal scratch']
  %s0 = inlined_call_operand.hbm [shape: f32[2,8,128], index: 0, kind: input, shape index: {}]
  %s1 = inlined_call_operand.hbm [shape: f32[2,8,128], index: 1, kind: input, shape index: {}]
  %s2 = inlined_call_operand.hbm [shape: f32[1,2,8,128], index: 2, kind: output, shape index: {}]
  %s3 = sld [smem:[#allocation0]]
  $region53: #{tpu_custom_call.1} parent=0
    _
  %s5 = ssub.s32 1, %s3
  %s6 = scalar_select 0, %s5, %s3
  $region1: #{tpu_custom_call.1} parent=0
    #allocation2 [shape = 'u8[8192]{0}', space=vmem, size = 0x2000, scoped, tag = 'input window, operand 0']
    #allocation3 [shape = 's32[2]{0}', space=sflag, size = 0x8, scoped, tag = 'scoped memory for tpu_custom_call.1']
    #allocation4 [shape = 's32[2]{0}', space=sflag, size = 0x8, scoped, tag = 'scoped memory for tpu_custom_call.1']
    #allocation5 [shape = 'u8[8192]{0}', space=vmem, size = 0x2000, scoped, tag = 'input window, operand 1']
    #allocation6 [shape = 's32[2]{0}', space=sflag, size = 0x8, scoped, tag = 'scoped memory for tpu_custom_call.1']
    #allocation7 [shape = 'u8[8192]{0}', space=vmem, size = 0x2000, scoped, tag = 'output window, operand 0']
    %7 = vsyncpa [#allocation3], 0
    %s8 = scalar_lea.sflag [#allocation3], 1
    %9 = vsyncpa %s8, 0
    %10 = vsyncpa [#allocation6], 0
    %s11 = scalar_lea.sflag [#allocation6], 1
    %12 = vsyncpa %s11, 0
    %13 = vsyncpa [#allocation4], 0
    %s14 = scalar_lea.sflag [#allocation4], 1
    %15 = vsyncpa %s14, 0
    loop: start=0, step=1, limit=4
    $region2: #{tpu_custom_call.1} parent=1 // loop_pre_header
      _
    $region3: #{tpu_custom_call.1} parent=1 // loop_header
      %s17 = sphi 0, %s21
      %p18 = scmp.ge.s32.totalorder %s17, 4
      %s24 = sphi 0, %s43
      %s25 = sphi 0, %s39
      %s26 = sphi 0, %s35
      %s27 = sphi 0, %s24
      %s28 = sphi 0, %s25
      %s29 = sphi 0, %s26
      %s30 = sphi 0, %s27
      %s31 = sphi 0, %s28
      %s32 = sphi 0, %s29
      %s50 = sphi 0, %s52
      %s53 = sphi 0, %s50
      %s54 = sphi 0, %s53
      %s70 = sphi 0, %s54
      %s80 = sphi 0, %s82
      %s83 = sphi 0, %s80
      %s84 = sphi 0, %s83
      %s100 = sphi 0, %s84
      %s108 = sphi 0, %s110
      %s111 = sphi 0, %s108
      %s112 = sphi 0, %s111
      %s128 = sphi 0, %s112
    $region4: #{tpu_custom_call.1} parent=1 // loop_header_branch
      %20 = sbr.rel (%p18) target = $region8
    $region5: #{tpu_custom_call.1} parent=1 // loop_body
      %s22 = ssub.s32 %s17, 1
      %s23 = ssub.s32 %s17, 2
      %s33 = sadd.s32 1, %s26
      %p34 = scmp.ge.s32.totalorder %s33, 1
      %s35 = scalar_select %p34, 0, %s33
      %s36 = sadd.s32 1, %s25
      %s37 = scalar_select %p34, %s36, %s25
      %p38 = scmp.ge.s32.totalorder %s37, 1
      %s39 = scalar_select %p38, 0, %s37
      %s40 = sadd.s32 1, %s24
      %s41 = scalar_select %p38, %s40, %s24
      %p42 = scmp.ge.s32.totalorder %s41, 2
      %s43 = scalar_select %p42, 0, %s41
      %s44 = sadd.s32 %s25, %s26
      %s45 = sadd.s32 %s39, %s35
      %s46 = ssub.s32 %s24, %s43
      %s47 = ssub.s32 %s44, %s45
      %s48 = sor.u32 %s46, %s47
      %p49 = scmp.eq.s32.totalorder %s48, 0
      %s51 = sadd.s32 %s50, 1
      %s52 = scalar_select %p49, %s50, %s51
      %p55 = pneg %p49
      %p56 = scmp.eq.s32.totalorder %s17, 1
      %p57 = por %p55, %p56
      %p58 = scmp.ne.s32.totalorder %s50, %s53
      %p59 = scmp.eq.s32.totalorder %s17, 0
      %p60 = por %p58, %p59
      %p61 = scmp.ne.s32.totalorder %s50, %s53
      %p62 = scmp.eq.s32.totalorder %s22, 1
      %p63 = por %p61, %p62
      %p64 = scmp.ne.s32.totalorder %s53, %s54
      %p65 = scmp.eq.s32.totalorder %s22, 0
      %p66 = por %p64, %p65
      %p67 = scmp.ne.s32.totalorder %s53, %s54
      %p68 = scmp.eq.s32.totalorder %s23, 1
      %p69 = por %p67, %p68
      %p71 = scmp.ne.s32.totalorder %s54, %s70
      %p72 = scmp.eq.s32.totalorder %s23, 0
      %p73 = por %p71, %p72
      %s74 = sadd.s32 %s25, %s26
      %s75 = sadd.s32 %s39, %s35
      %s76 = ssub.s32 %s24, %s43
      %s77 = ssub.s32 %s74, %s75
      %s78 = sor.u32 %s76, %s77
      %p79 = scmp.eq.s32.totalorder %s78, 0
      %s81 = sadd.s32 %s80, 1
      %s82 = scalar_select %p79, %s80, %s81
      %p85 = pneg %p79
      %p86 = scmp.eq.s32.totalorder %s17, 1
      %p87 = por %p85, %p86
      %p88 = scmp.ne.s32.totalorder %s80, %s83
      %p89 = scmp.eq.s32.totalorder %s17, 0
      %p90 = por %p88, %p89
      %p91 = scmp.ne.s32.totalorder %s80, %s83
      %p92 = scmp.eq.s32.totalorder %s22, 1
      %p93 = por %p91, %p92
      %p94 = scmp.ne.s32.totalorder %s83, %s84
      %p95 = scmp.eq.s32.totalorder %s22, 0
      %p96 = por %p94, %p95
      %p97 = scmp.ne.s32.totalorder %s83, %s84
      %p98 = scmp.eq.s32.totalorder %s23, 1
      %p99 = por %p97, %p98
      %p101 = scmp.ne.s32.totalorder %s84, %s100
      %p102 = scmp.eq.s32.totalorder %s23, 0
      %p103 = por %p101, %p102
      %s104 = ssub.s32 %s25, %s39
      %s105 = ssub.s32 %s24, %s43
      %s106 = sor.u32 %s104, %s105
      %p107 = scmp.eq.s32.totalorder %s106, 0
      %s109 = sadd.s32 %s108, 1
      %s110 = scalar_select %p107, %s108, %s109
      %p113 = pneg %p107
      %p114 = scmp.eq.s32.totalorder %s17, 1
      %p115 = por %p113, %p114
      %p116 = scmp.ne.s32.totalorder %s108, %s111
      %p117 = scmp.eq.s32.totalorder %s17, 0
      %p118 = por %p116, %p117
      %p119 = scmp.ne.s32.totalorder %s108, %s111
      %p120 = scmp.eq.s32.totalorder %s22, 1
      %p121 = por %p119, %p120
      %p122 = scmp.ne.s32.totalorder %s111, %s112
      %p123 = scmp.eq.s32.totalorder %s22, 0
      %p124 = por %p122, %p123
      %p125 = scmp.ne.s32.totalorder %s111, %s112
      %p126 = scmp.eq.s32.totalorder %s23, 1
      %p127 = por %p125, %p126
      %p129 = scmp.ne.s32.totalorder %s112, %s128
      %p130 = scmp.eq.s32.totalorder %s23, 0
      %p131 = por %p129, %p130
      %p132 = scmp.le.s32.totalorder 1, %s17
      %p133 = scmp.lt.s32.totalorder %s17, 3
      %p134 = pnand %p132, %p133
      %p135 = pneg %p134
      // Predicated region
      $region9: #{tpu_custom_call.1} parent=5 // pred_check
        _
      $region10: #{tpu_custom_call.1} parent=5 // pred_check_branch
        %137 = sbr.rel (%p134) target = $region12
      $region11: #{tpu_custom_call.1} parent=5 // pred_region
        %s138 = ssub.s32 %s17, 1
      $region12: #{tpu_custom_call.1} parent=5 // pred_fallthru
        _
      %p139 = scmp.lt.s32.totalorder %s17, 2
      // Predicated region
      $region13: #{tpu_custom_call.1} parent=5 // pred_check
        %p140 = pneg %p139
      $region14: #{tpu_custom_call.1} parent=5 // pred_check_branch
        %142 = sbr.rel (%p140) target = $region16
      $region15: #{tpu_custom_call.1} parent=5 // pred_region
        // Predicated region
        $region17: #{tpu_custom_call.1} parent=15 // pred_check
          %p143 = pneg %p60
        $region18: #{tpu_custom_call.1} parent=15 // pred_check_branch
          %145 = sbr.rel (%p143) target = $region20
        $region19: #{tpu_custom_call.1} parent=15 // pred_region
          %s146 = sand.u32 %s50, 1
          %s147 = scalar_lea.sflag [#allocation3], %s146
          %s148 = sand.u32 %s50, 1
          %s149 = smul.addr %s148, 8
          %s150 = scalar_lea.vmem [#allocation2], %s149
          %s151 = sadd.s32 %s25, %s26
          %s153 = ssub.s32 128, 128
          %154 = vsyncadd %s147, %s153
          %s155 = sadd.s32 %s151, %s24
          %s156 = smul.addr %s155, 128
          %s157 = scalar_lea.hbm %s0, %s156
          %s159 = sshll.u32 %s150, 4
          %s160 = int_to_ptr.vmem [resolvable:$true] %s159
          %162 = dma.hbm_to_vmem [thread:$0]  %s157, 128, %s160, %s147
        $region20: #{tpu_custom_call.1} parent=15 // pred_fallthru
          _
        // Predicated region
        $region21: #{tpu_custom_call.1} parent=15 // pred_check
          %p163 = pneg %p90
        $region22: #{tpu_custom_call.1} parent=15 // pred_check_branch
          %165 = sbr.rel (%p163) target = $region24
        $region23: #{tpu_custom_call.1} parent=15 // pred_region
          %s166 = sand.u32 %s80, 1
          %s167 = scalar_lea.sflag [#allocation6], %s166
          %s168 = sand.u32 %s80, 1
          %s169 = smul.addr %s168, 8
          %s170 = scalar_lea.vmem [#allocation5], %s169
          %s171 = sadd.s32 %s25, %s26
          %s173 = ssub.s32 128, 128
          %174 = vsyncadd %s167, %s173
          %s175 = sadd.s32 %s171, %s24
          %s176 = smul.addr %s175, 128
          %s177 = scalar_lea.hbm %s1, %s176
          %s179 = sshll.u32 %s170, 4
          %s180 = int_to_ptr.vmem [resolvable:$true] %s179
          %182 = dma.hbm_to_vmem [thread:$0]  %s177, 128, %s180, %s167
        $region24: #{tpu_custom_call.1} parent=15 // pred_fallthru
          _
      $region16: #{tpu_custom_call.1} parent=5 // pred_fallthru
        _
      %p183 = scmp.le.s32.totalorder 1, %s17
      %p184 = scmp.lt.s32.totalorder %s17, 3
      %p185 = pnand %p183, %p184
      %p186 = pneg %p185
      // Predicated region
      $region25: #{tpu_custom_call.1} parent=5 // pred_check
        _
      $region26: #{tpu_custom_call.1} parent=5 // pred_check_branch
        %188 = sbr.rel (%p185) target = $region28
      $region27: #{tpu_custom_call.1} parent=5 // pred_region
        %s189 = ssub.s32 %s17, 1
        %s190 = sand.u32 %s53, 1
        %s191 = scalar_lea.sflag [#allocation3], %s190
        %s192 = sand.u32 %s53, 1
        %s193 = smul.addr %s192, 8
        %s194 = scalar_lea.vmem [#allocation2], %s193
        // Predicated region
        $region29: #{tpu_custom_call.1} parent=27 // pred_check
          %p195 = pneg %p66
        $region30: #{tpu_custom_call.1} parent=27 // pred_check_branch
          %197 = sbr.rel (%p195) target = $region32
        $region31: #{tpu_custom_call.1} parent=27 // pred_region
          %198 = dma.done %s191, 128
        $region32: #{tpu_custom_call.1} parent=27 // pred_fallthru
          _
        %s199 = sand.u32 %s83, 1
        %s200 = scalar_lea.sflag [#allocation6], %s199
        %s201 = sand.u32 %s83, 1
        %s202 = smul.addr %s201, 8
        %s203 = scalar_lea.vmem [#allocation5], %s202
        // Predicated region
        $region33: #{tpu_custom_call.1} parent=27 // pred_check
          %p204 = pneg %p96
        $region34: #{tpu_custom_call.1} parent=27 // pred_check_branch
          %206 = sbr.rel (%p204) target = $region36
        $region35: #{tpu_custom_call.1} parent=27 // pred_region
          %207 = dma.done %s200, 128
        $region36: #{tpu_custom_call.1} parent=27 // pred_fallthru
          _
        %s208 = sand.u32 %s53, 1
        %s209 = scalar_lea.sflag [#allocation3], %s208
        %s210 = sand.u32 %s53, 1
        %s211 = smul.addr %s210, 8
        %s212 = scalar_lea.vmem [#allocation2], %s211
        %p213 = pneg %p66
        %p214 = pneg %p63
        %s215 = sand.u32 %s83, 1
        %s216 = scalar_lea.sflag [#allocation6], %s215
        %s217 = sand.u32 %s83, 1
        %s218 = smul.addr %s217, 8
        %s219 = scalar_lea.vmem [#allocation5], %s218
        %p220 = pneg %p96
        %p221 = pneg %p93
        %p222 = pneg %p124
        %p223 = pneg %p121
        %s224 = sand.u32 %s111, 1
        %s225 = scalar_lea.sflag [#allocation4], %s224
        %s226 = sand.u32 %s111, 1
        %s227 = smul.addr %s226, 8
        %s228 = scalar_lea.vmem [#allocation7], %s227
        %s229 = sadd.s32 %s28, %s29
        %s230 = sadd.s32 %s28, %s29
        %p231 = scmp.eq.s32.totalorder %s29, 0
        // Predicated region
        $region37: #{tpu_custom_call.1} parent=27 // pred_check
          %p232 = pneg %p231
        $region38: #{tpu_custom_call.1} parent=27 // pred_check_branch
          %234 = sbr.rel (%p232) target = $region40
        $region39: #{tpu_custom_call.1} parent=27 // pred_region
          %235 = vst [vmem:[%s228] sm:$0xff] 0.0
        $region40: #{tpu_custom_call.1} parent=27 // pred_fallthru
          _
        %v236 = vld [vmem:[%s194] sm:$0xff]
        %v237 = vld [vmem:[%s203] sm:$0xff]
        %v238 = vlog2.pop %v236
        %v239 = vmul.f32 %v238, 0.6931472
        %v240 = vmax.f32 %v239, -100.0
        %v241 = vsub.f32 0.0, %v236
        %v242 = vadd.f32 %v241, 1.0
        %v243 = vlog2.pop %v242
        %v244 = vmul.f32 %v243, 0.6931472
        %v245 = vmul.f32 -0.5, %v241
        %v246 = vadd.f32 %v245, 1.0
        %v247 = vmul.f32 %v246, %v241
        %v248 = vand.u32 2147483647, %v241
        %vm249 = vcmp.lt.f32.partialorder %v248, 0.0004427343
        %v250 = vsel %vm249, %v247, %v244
        %v251 = vmax.f32 %v250, -100.0
        %v252 = vsub.f32 %v240, %v251
        %v253 = vmul.f32 %v237, %v252
        %v254 = vadd.f32 %v251, %v253
        %v255 = vsub.f32 0.0, %v254
        %v256 = vld [vmem:[%s228] sm:$0xff]
        %v257 = vadd.f32 %v255, 0.0
        %v258 = vadd.f32 %v256, %v257
        %259 = vst [vmem:[%s228] sm:$0xff] %v258
        %s260 = sand.u32 %s111, 1
        %s261 = scalar_lea.sflag [#allocation4], %s260
        %s262 = sand.u32 %s111, 1
        %s263 = smul.addr %s262, 8
        %s264 = scalar_lea.vmem [#allocation7], %s263
        // Predicated region
        $region41: #{tpu_custom_call.1} parent=27 // pred_check
          %p265 = pneg %p121
        $region42: #{tpu_custom_call.1} parent=27 // pred_check_branch
          %267 = sbr.rel (%p265) target = $region44
        $region43: #{tpu_custom_call.1} parent=27 // pred_region
          %s269 = ssub.s32 128, 128
          %270 = vsyncadd %s261, %s269
          %s271 = smul.addr %s28, 2
          %s272 = sadd.s32 %s27, %s271
          %s273 = smul.addr %s272, 128
          %s274 = scalar_lea.hbm %s2, %s273
          %s276 = sshll.u32 %s264, 4
          %s277 = int_to_ptr.vmem [resolvable:$true] %s276
          %279 = dma.vmem_to_hbm [thread:$0]  %s277, 128, %s274, %s261
        $region44: #{tpu_custom_call.1} parent=27 // pred_fallthru
          _
      $region28: #{tpu_custom_call.1} parent=5 // pred_fallthru
        _
      %p280 = scmp.le.s32.totalorder 2, %s17
      // Predicated region
      $region45: #{tpu_custom_call.1} parent=5 // pred_check
        %p281 = pneg %p280
      $region46: #{tpu_custom_call.1} parent=5 // pred_check_branch
        %283 = sbr.rel (%p281) target = $region48
      $region47: #{tpu_custom_call.1} parent=5 // pred_region
        %s284 = ssub.s32 %s17, 2
        // Predicated region
        $region49: #{tpu_custom_call.1} parent=47 // pred_check
          %p285 = pneg %p127
        $region50: #{tpu_custom_call.1} parent=47 // pred_check_branch
          %287 = sbr.rel (%p285) target = $region52
        $region51: #{tpu_custom_call.1} parent=47 // pred_region
          %s288 = sand.u32 %s112, 1
          %s289 = scalar_lea.sflag [#allocation4], %s288
          %s290 = sand.u32 %s112, 1
          %s291 = smul.addr %s290, 8
          %s292 = scalar_lea.vmem [#allocation7], %s291
          %293 = dma.done %s289, 128
        $region52: #{tpu_custom_call.1} parent=47 // pred_fallthru
          _
      $region48: #{tpu_custom_call.1} parent=5 // pred_fallthru
        _
    $region6: #{tpu_custom_call.1} parent=1 // loop_footer
      %s21 = sadd.s32 1, %s17
    $region7: #{tpu_custom_call.1} parent=1 // loop_footer_branch
      %16 = sbr.rel target = $region3
    $region8: #{tpu_custom_call.1} parent=1 // loop_exit
      _
    %294 = vsyncpa [#allocation3], 1
    %s295 = scalar_lea.sflag [#allocation3], 1
    %296 = vsyncpa %s295, 1
    %297 = vsyncpa [#allocation6], 1
    %s298 = scalar_lea.sflag [#allocation6], 1
    %299 = vsyncpa %s298, 1
    %300 = vsyncpa [#allocation4], 1
    %s301 = scalar_lea.sflag [#allocation4], 1
    %302 = vsyncpa %s301, 1

</llo_original>
